<compile_context>
chip_gen: v7x
topology: tpu7x:2x2x1
jax: 0.10.0
libtpu: 0.0.40
codegen_flags: <defaults>
</compile_context>

<pallas_src>
import functools

import jax
import jax.numpy as jnp
import numpy as np
from jax.experimental import pallas as pl
from jax.experimental.pallas import tpu as pltpu

HIDDEN = 10          # hidden width of the MLP
LANES = 128          # TPU lane width
SUBLANES = 8         # TPU sublane count (f32)
CHUNK_ROWS = 128     # in-kernel row-chunk (rows of 128 batch elements)
PARAM_SLOTS = 64     # padded parameter vector length (41 slots actually used)


def _cdiv(a: int, b: int) -> int:
    return -(-a // b)


def _round_up(x: int, m: int) -> int:
    return ((x + m - 1) // m) * m


def _default_compute_dtype():
    """bf16 hidden-layer math on v6e/v7x (bf16 VPU), f32 everywhere else."""
    try:
        kind = jax.devices()[0].device_kind.lower()
    except Exception:  # pragma: no cover - defensive
        return jnp.float32
    if "v6" in kind or "v7" in kind:
        return jnp.bfloat16
    return jnp.float32


def _deinterleave_matrix(dtype):
    """(256, 256) selection matrix: interleaved [x0,x1,x0,x1,...] lanes ->
    [x0 dense (128) | x1 dense (128)].  Applied on the idle MXU in-kernel."""
    d = np.zeros((2 * LANES, 2 * LANES), np.float32)
    cols = np.arange(LANES)
    d[2 * cols, cols] = 1.0
    d[2 * cols + 1, cols + LANES] = 1.0
    return jnp.asarray(d, dtype)


def xor_mlp_kernel(params_ref, d_ref, x_ref, o_ref, *,
                   hidden, chunk, n_chunks, compute_dtype):
    # params_ref: (PARAM_SLOTS,) f32 in SMEM, packed as
    #   [0:10] w1[0,:], [10:20] w1[1,:], [20:30] b1, [30:40] w2[:,0], [40] b2
    # d_ref: (256, 256) de-interleave matrix (compute dtype)
    # x_ref: (TR, 256) interleaved lane-dense input block
    # o_ref: (TR, 128) lane-dense output block
    cd = compute_dtype
    f32 = jnp.float32

    dmat = d_ref[...]                                    # (256, 256)

    # Hoist the 41 scalar parameters out of the chunk loop: one SMEM read each
    # per grid step; in the arithmetic below they are cheap sreg->vreg splats,
    # not materialized (TR,128) broadcasts.
    w0s = [params_ref[j].astype(cd) for j in range(hidden)]
    w1s = [params_ref[hidden + j].astype(cd) for j in range(hidden)]
    b1s = [params_ref[2 * hidden + j].astype(cd) for j in range(hidden)]
    w2s = [params_ref[3 * hidden + j].astype(cd) for j in range(hidden)]
    b2 = params_ref[4 * hidden]                          # f32, used in f32 epilogue

    def body(c, carry):
        off = pl.multiple_of(c * chunk, chunk)
        xi = x_ref[pl.ds(off, chunk), :].astype(cd)      # (CH, 256) interleaved
        # De-interleave the two features on the MXU (idle otherwise):
        #   xd[:, :128] = feature 0, xd[:, 128:] = feature 1, both batch-dense.
        xd = jnp.dot(xi, dmat, preferred_element_type=f32).astype(cd)
        x0 = xd[:, :LANES]
        x1 = xd[:, LANES:]

        acc = None
        for j in range(hidden):                          # static unroll; pure VPU
            h = jnp.maximum(x0 * w0s[j] + x1 * w1s[j] + b1s[j], 0.0)
            t = h * w2s[j]
            acc = t if acc is None else acc + t

        # f32 sigmoid epilogue on the EUP: 1 / (1 + exp(-z)) with an approx
        # reciprocal + one Newton step instead of a VALU divide.
        z = jnp.maximum(acc.astype(f32) + b2, -60.0)     # guard exp overflow
        e = jnp.exp(-z)
        den = 1.0 + e
        r = pl.reciprocal(den, approx=True)
        r = r * (2.0 - den * r)                          # Newton refinement
        o_ref[pl.ds(off, chunk), :] = r.astype(o_ref.dtype)
        return carry

    jax.lax.fori_loop(0, n_chunks, body, 0)


def xor_forward(x, w1, b1, w2, b2, *, block_rows: int = 262144,
                compute_dtype=None, out_dtype=jnp.float32):
    """x: (B, 2) -> (B, 1). Same math as Linear(2,10)+ReLU -> Linear(10,1)+sigmoid.

    w1: (2, 10) (pre-transposed vs. PyTorch's (out, in)), b1: (10,)/(1,10),
    w2: (10, 1), b2: (1, 1) or scalar.  block_rows = batch elements per grid step.
    """
    assert x.ndim == 2 and x.shape[1] == 2, "expected input of shape (B, 2)"
    B = x.shape[0]
    cd = compute_dtype if compute_dtype is not None else _default_compute_dtype()

    # Rows of 128 batch elements; pad only to a multiple of 8 rows (1024 elems).
    R = _round_up(_cdiv(B, LANES), SUBLANES)
    Bp = R * LANES

    # Tile rows per grid step: as large as block_rows allows (default 2048 rows
    # = 256K elems/step, ~6 MiB double-buffered VMEM), but keep >=2 grid steps
    # once R > 128 so v7x's second TensorCore has parallel work, and keep every
    # block dim a multiple of (8, 128).
    target_tr = max(CHUNK_ROWS,
                    min(4096, (block_rows // LANES) // CHUNK_ROWS * CHUNK_ROWS))
    if R <= CHUNK_ROWS:
        TR, CH = R, R
    else:
        TR = min(target_tr, _round_up(_cdiv(R, 2), CHUNK_ROWS))
        CH = CHUNK_ROWS
    n_chunks = TR // CH
    grid_steps = _cdiv(R, TR)

    # Pack all parameters into one small SMEM-resident vector (single DMA).
    w1 = jnp.asarray(w1, jnp.float32).reshape(2, HIDDEN)
    b1 = jnp.asarray(b1, jnp.float32).reshape(HIDDEN)
    w2 = jnp.asarray(w2, jnp.float32).reshape(HIDDEN)
    b2 = jnp.asarray(b2, jnp.float32).reshape(1)
    params = jnp.concatenate(
        [w1[0], w1[1], b1, w2, b2,
         jnp.zeros((PARAM_SLOTS - (4 * HIDDEN + 1),), jnp.float32)])

    # Interleaved lane-dense input: (B, 2) -> pad to (Bp, 2) -> (R, 256).
    # This is a pure row-major reshape -- no HBM transpose pass.
    in_dt = x.dtype if x.dtype in (jnp.float32, jnp.bfloat16) else jnp.float32
    xf = jnp.asarray(x, in_dt)
    if Bp != B:
        xf = jnp.pad(xf, ((0, Bp - B), (0, 0)))
    xi = xf.reshape(R, 2 * LANES)

    dmat = _deinterleave_matrix(cd)

    kernel = functools.partial(xor_mlp_kernel, hidden=HIDDEN, chunk=CH,
                               n_chunks=n_chunks, compute_dtype=cd)

    cost = pl.CostEstimate(
        flops=2 * Bp * (2 * HIDDEN + HIDDEN) + 2 * R * (2 * LANES) * (2 * LANES),
        transcendentals=2 * Bp,                                # exp + reciprocal
        bytes_accessed=Bp * 2 * 4 + Bp * 4 + PARAM_SLOTS * 4
        + (2 * LANES) * (2 * LANES) * 4,
    )

    out = pl.pallas_call(
        kernel,
        out_shape=jax.ShapeDtypeStruct((R, LANES), out_dtype),
        grid=(grid_steps,),
        in_specs=[
            pl.BlockSpec(memory_space=pltpu.MemorySpace.SMEM),      # packed params
            pl.BlockSpec((2 * LANES, 2 * LANES), lambda i: (0, 0)),  # de-interleave mat
            pl.BlockSpec((TR, 2 * LANES), lambda i: (i, 0)),         # x tile
        ],
        out_specs=pl.BlockSpec((TR, LANES), lambda i: (i, 0)),       # lane-dense out
        compiler_params=pltpu.CompilerParams(
            dimension_semantics=("parallel",)),
        cost_estimate=cost,
    )(params, dmat, xi)

    return out.reshape(-1)[:B].reshape(B, 1)


def init_params(key):
    # Same shapes as nn.Linear(2,10) / nn.Linear(10,1); weights kept (in, out).
    k1, k2, k3, k4 = jax.random.split(key, 4)
    w1 = jax.random.uniform(k1, (2, HIDDEN), jnp.float32, -0.5, 0.5)
    b1 = jax.random.uniform(k2, (1, HIDDEN), jnp.float32, -0.5, 0.5)
    w2 = jax.random.uniform(k3, (HIDDEN, 1), jnp.float32, -0.5, 0.5)
    b2 = jax.random.uniform(k4, (1, 1), jnp.float32, -0.5, 0.5)
    return w1, b1, w2, b2


if __name__ == "__main__":
    key = jax.random.PRNGKey(0)
    kx, kp, kx2 = jax.random.split(key, 3)

    w1, b1, w2, b2 = init_params(kp)

    # bf16 hidden math on v6e/v7x needs a looser tolerance; f32 path is tight.
    atol = 5e-2 if _default_compute_dtype() == jnp.bfloat16 else 1e-3

    def ref_fwd(xv):
        return jax.nn.sigmoid(jnp.maximum(xv @ w1 + b1, 0.0) @ w2 + b2)

    # 1) Tiny XOR-style batch (single grid step).
    x = jax.random.bernoulli(kx, 0.5, (8, 2)).astype(jnp.float32)
    out = jax.block_until_ready(xor_forward(x, w1, b1, w2, b2))
    assert out.shape == (8, 1)
    assert jnp.allclose(out, ref_fwd(x), atol=atol), "mismatch vs reference (small)"

    # 2) Multi-step grid with a partial last block and a multi-chunk inner loop.
    #    Inputs quantized to 1/16 so they are bf16-exact (isolates arithmetic error).
    x2 = jnp.round(jax.random.normal(kx2, (33000, 2), jnp.float32) * 16.0) / 16.0
    out2 = jax.block_until_ready(xor_forward(x2, w1, b1, w2, b2))
    assert out2.shape == (33000, 1)
    assert jnp.allclose(out2, ref_fwd(x2), atol=atol), "mismatch vs reference (large)"

    print("KERNEL_OK")
</pallas_src>

<mosaic_0001>
module attributes {stable_mosaic.version = 11 : i64} {
  func.func @xor_mlp_kernel(%arg0: i32, %arg1: memref<64xf32, #tpu.memory_space<smem>>, %arg2: memref<256x256xf32, #tpu.memory_space<vmem>>, %arg3: memref<8x256xf32, #tpu.memory_space<vmem>>, %arg4: memref<8x128xf32, #tpu.memory_space<vmem>>) attributes {dimension_semantics = [#tpu.dimension_semantics<parallel>], iteration_bounds = array<i64: 1>, scalar_prefetch = 0 : i64, scratch_operands = 0 : i64, tpu.core_type = #tpu.core_type<tc>, window_params = [{transform_indices = @transform_0, window_bounds = array<i64: 64>}, {pipeline_mode = #tpu.pipeline_mode<synchronous>, transform_indices = @transform_1, window_bounds = array<i64: 256, 256>}, {transform_indices = @transform_2, window_bounds = array<i64: 8, 256>}, {transform_indices = @transform_3, window_bounds = array<i64: 8, 128>}]} {
    %c0 = arith.constant 0 : index
    %c0_0 = arith.constant 0 : index
    %0 = vector.load %arg2[%c0, %c0_0] : memref<256x256xf32, #tpu.memory_space<vmem>>, vector<256x256xf32>
    %c0_1 = arith.constant 0 : index
    %1 = memref.load %arg1[%c0_1] : memref<64xf32, #tpu.memory_space<smem>>
    %c1 = arith.constant 1 : index
    %2 = memref.load %arg1[%c1] : memref<64xf32, #tpu.memory_space<smem>>
    %c2 = arith.constant 2 : index
    %3 = memref.load %arg1[%c2] : memref<64xf32, #tpu.memory_space<smem>>
    %c3 = arith.constant 3 : index
    %4 = memref.load %arg1[%c3] : memref<64xf32, #tpu.memory_space<smem>>
    %c4 = arith.constant 4 : index
    %5 = memref.load %arg1[%c4] : memref<64xf32, #tpu.memory_space<smem>>
    %c5 = arith.constant 5 : index
    %6 = memref.load %arg1[%c5] : memref<64xf32, #tpu.memory_space<smem>>
    %c6 = arith.constant 6 : index
    %7 = memref.load %arg1[%c6] : memref<64xf32, #tpu.memory_space<smem>>
    %c7 = arith.constant 7 : index
    %8 = memref.load %arg1[%c7] : memref<64xf32, #tpu.memory_space<smem>>
    %c8 = arith.constant 8 : index
    %9 = memref.load %arg1[%c8] : memref<64xf32, #tpu.memory_space<smem>>
    %c9 = arith.constant 9 : index
    %10 = memref.load %arg1[%c9] : memref<64xf32, #tpu.memory_space<smem>>
    %c10 = arith.constant 10 : index
    %11 = memref.load %arg1[%c10] : memref<64xf32, #tpu.memory_space<smem>>
    %c11 = arith.constant 11 : index
    %12 = memref.load %arg1[%c11] : memref<64xf32, #tpu.memory_space<smem>>
    %c12 = arith.constant 12 : index
    %13 = memref.load %arg1[%c12] : memref<64xf32, #tpu.memory_space<smem>>
    %c13 = arith.constant 13 : index
    %14 = memref.load %arg1[%c13] : memref<64xf32, #tpu.memory_space<smem>>
    %c14 = arith.constant 14 : index
    %15 = memref.load %arg1[%c14] : memref<64xf32, #tpu.memory_space<smem>>
    %c15 = arith.constant 15 : index
    %16 = memref.load %arg1[%c15] : memref<64xf32, #tpu.memory_space<smem>>
    %c16 = arith.constant 16 : index
    %17 = memref.load %arg1[%c16] : memref<64xf32, #tpu.memory_space<smem>>
    %c17 = arith.constant 17 : index
    %18 = memref.load %arg1[%c17] : memref<64xf32, #tpu.memory_space<smem>>
    %c18 = arith.constant 18 : index
    %19 = memref.load %arg1[%c18] : memref<64xf32, #tpu.memory_space<smem>>
    %c19 = arith.constant 19 : index
    %20 = memref.load %arg1[%c19] : memref<64xf32, #tpu.memory_space<smem>>
    %c20 = arith.constant 20 : index
    %21 = memref.load %arg1[%c20] : memref<64xf32, #tpu.memory_space<smem>>
    %c21 = arith.constant 21 : index
    %22 = memref.load %arg1[%c21] : memref<64xf32, #tpu.memory_space<smem>>
    %c22 = arith.constant 22 : index
    %23 = memref.load %arg1[%c22] : memref<64xf32, #tpu.memory_space<smem>>
    %c23 = arith.constant 23 : index
    %24 = memref.load %arg1[%c23] : memref<64xf32, #tpu.memory_space<smem>>
    %c24 = arith.constant 24 : index
    %25 = memref.load %arg1[%c24] : memref<64xf32, #tpu.memory_space<smem>>
    %c25 = arith.constant 25 : index
    %26 = memref.load %arg1[%c25] : memref<64xf32, #tpu.memory_space<smem>>
    %c26 = arith.constant 26 : index
    %27 = memref.load %arg1[%c26] : memref<64xf32, #tpu.memory_space<smem>>
    %c27 = arith.constant 27 : index
    %28 = memref.load %arg1[%c27] : memref<64xf32, #tpu.memory_space<smem>>
    %c28 = arith.constant 28 : index
    %29 = memref.load %arg1[%c28] : memref<64xf32, #tpu.memory_space<smem>>
    %c29 = arith.constant 29 : index
    %30 = memref.load %arg1[%c29] : memref<64xf32, #tpu.memory_space<smem>>
    %c30 = arith.constant 30 : index
    %31 = memref.load %arg1[%c30] : memref<64xf32, #tpu.memory_space<smem>>
    %c31 = arith.constant 31 : index
    %32 = memref.load %arg1[%c31] : memref<64xf32, #tpu.memory_space<smem>>
    %c32 = arith.constant 32 : index
    %33 = memref.load %arg1[%c32] : memref<64xf32, #tpu.memory_space<smem>>
    %c33 = arith.constant 33 : index
    %34 = memref.load %arg1[%c33] : memref<64xf32, #tpu.memory_space<smem>>
    %c34 = arith.constant 34 : index
    %35 = memref.load %arg1[%c34] : memref<64xf32, #tpu.memory_space<smem>>
    %c35 = arith.constant 35 : index
    %36 = memref.load %arg1[%c35] : memref<64xf32, #tpu.memory_space<smem>>
    %c36 = arith.constant 36 : index
    %37 = memref.load %arg1[%c36] : memref<64xf32, #tpu.memory_space<smem>>
    %c37 = arith.constant 37 : index
    %38 = memref.load %arg1[%c37] : memref<64xf32, #tpu.memory_space<smem>>
    %c38 = arith.constant 38 : index
    %39 = memref.load %arg1[%c38] : memref<64xf32, #tpu.memory_space<smem>>
    %c39 = arith.constant 39 : index
    %40 = memref.load %arg1[%c39] : memref<64xf32, #tpu.memory_space<smem>>
    %c40 = arith.constant 40 : index
    %41 = memref.load %arg1[%c40] : memref<64xf32, #tpu.memory_space<smem>>
    %c0_i32 = arith.constant 0 : i32
    %c8_i32 = arith.constant 8 : i32
    %42 = arith.muli %c0_i32, %c8_i32 : i32
    %43 = tpu.assume_multiple %42, 8 : i32
    %44 = arith.index_cast %43 : i32 to index
    %c0_2 = arith.constant 0 : index
    %45 = vector.load %arg3[%44, %c0_2] : memref<8x256xf32, #tpu.memory_space<vmem>>, vector<8x256xf32>
    %cst = arith.constant dense<0.000000e+00> : vector<8x256xf32>
    %46 = tpu.matmul %45, %0, %cst {dimension_numbers = #tpu.dot_dimension_numbers<[1], [0], [0], [1], [0, 0, 1, 1], [], []>} : vector<8x256xf32>, vector<256x256xf32>, vector<8x256xf32> -> vector<8x256xf32>
    %47 = vector.extract_strided_slice %46 {offsets = [0, 0], sizes = [8, 128], strides = [1, 1]} : vector<8x256xf32> to vector<8x128xf32>
    %48 = vector.extract_strided_slice %46 {offsets = [0, 128], sizes = [8, 128], strides = [1, 1]} : vector<8x256xf32> to vector<8x128xf32>
    %49 = vector.broadcast %1 : f32 to vector<8x128xf32>
    %50 = arith.mulf %47, %49 : vector<8x128xf32>
    %51 = vector.broadcast %11 : f32 to vector<8x128xf32>
    %52 = arith.mulf %48, %51 : vector<8x128xf32>
    %53 = arith.addf %50, %52 : vector<8x128xf32>
    %54 = vector.broadcast %21 : f32 to vector<8x128xf32>
    %55 = arith.addf %53, %54 : vector<8x128xf32>
    %cst_3 = arith.constant 0.000000e+00 : f32
    %56 = vector.broadcast %cst_3 : f32 to vector<8x128xf32>
    %57 = arith.maximumf %55, %56 : vector<8x128xf32>
    %58 = vector.broadcast %31 : f32 to vector<8x128xf32>
    %59 = arith.mulf %57, %58 : vector<8x128xf32>
    %60 = vector.broadcast %2 : f32 to vector<8x128xf32>
    %61 = arith.mulf %47, %60 : vector<8x128xf32>
    %62 = vector.broadcast %12 : f32 to vector<8x128xf32>
    %63 = arith.mulf %48, %62 : vector<8x128xf32>
    %64 = arith.addf %61, %63 : vector<8x128xf32>
    %65 = vector.broadcast %22 : f32 to vector<8x128xf32>
    %66 = arith.addf %64, %65 : vector<8x128xf32>
    %cst_4 = arith.constant 0.000000e+00 : f32
    %67 = vector.broadcast %cst_4 : f32 to vector<8x128xf32>
    %68 = arith.maximumf %66, %67 : vector<8x128xf32>
    %69 = vector.broadcast %32 : f32 to vector<8x128xf32>
    %70 = arith.mulf %68, %69 : vector<8x128xf32>
    %71 = arith.addf %59, %70 : vector<8x128xf32>
    %72 = vector.broadcast %3 : f32 to vector<8x128xf32>
    %73 = arith.mulf %47, %72 : vector<8x128xf32>
    %74 = vector.broadcast %13 : f32 to vector<8x128xf32>
    %75 = arith.mulf %48, %74 : vector<8x128xf32>
    %76 = arith.addf %73, %75 : vector<8x128xf32>
    %77 = vector.broadcast %23 : f32 to vector<8x128xf32>
    %78 = arith.addf %76, %77 : vector<8x128xf32>
    %cst_5 = arith.constant 0.000000e+00 : f32
    %79 = vector.broadcast %cst_5 : f32 to vector<8x128xf32>
    %80 = arith.maximumf %78, %79 : vector<8x128xf32>
    %81 = vector.broadcast %33 : f32 to vector<8x128xf32>
    %82 = arith.mulf %80, %81 : vector<8x128xf32>
    %83 = arith.addf %71, %82 : vector<8x128xf32>
    %84 = vector.broadcast %4 : f32 to vector<8x128xf32>
    %85 = arith.mulf %47, %84 : vector<8x128xf32>
    %86 = vector.broadcast %14 : f32 to vector<8x128xf32>
    %87 = arith.mulf %48, %86 : vector<8x128xf32>
    %88 = arith.addf %85, %87 : vector<8x128xf32>
    %89 = vector.broadcast %24 : f32 to vector<8x128xf32>
    %90 = arith.addf %88, %89 : vector<8x128xf32>
    %cst_6 = arith.constant 0.000000e+00 : f32
    %91 = vector.broadcast %cst_6 : f32 to vector<8x128xf32>
    %92 = arith.maximumf %90, %91 : vector<8x128xf32>
    %93 = vector.broadcast %34 : f32 to vector<8x128xf32>
    %94 = arith.mulf %92, %93 : vector<8x128xf32>
    %95 = arith.addf %83, %94 : vector<8x128xf32>
    %96 = vector.broadcast %5 : f32 to vector<8x128xf32>
    %97 = arith.mulf %47, %96 : vector<8x128xf32>
    %98 = vector.broadcast %15 : f32 to vector<8x128xf32>
    %99 = arith.mulf %48, %98 : vector<8x128xf32>
    %100 = arith.addf %97, %99 : vector<8x128xf32>
    %101 = vector.broadcast %25 : f32 to vector<8x128xf32>
    %102 = arith.addf %100, %101 : vector<8x128xf32>
    %cst_7 = arith.constant 0.000000e+00 : f32
    %103 = vector.broadcast %cst_7 : f32 to vector<8x128xf32>
    %104 = arith.maximumf %102, %103 : vector<8x128xf32>
    %105 = vector.broadcast %35 : f32 to vector<8x128xf32>
    %106 = arith.mulf %104, %105 : vector<8x128xf32>
    %107 = arith.addf %95, %106 : vector<8x128xf32>
    %108 = vector.broadcast %6 : f32 to vector<8x128xf32>
    %109 = arith.mulf %47, %108 : vector<8x128xf32>
    %110 = vector.broadcast %16 : f32 to vector<8x128xf32>
    %111 = arith.mulf %48, %110 : vector<8x128xf32>
    %112 = arith.addf %109, %111 : vector<8x128xf32>
    %113 = vector.broadcast %26 : f32 to vector<8x128xf32>
    %114 = arith.addf %112, %113 : vector<8x128xf32>
    %cst_8 = arith.constant 0.000000e+00 : f32
    %115 = vector.broadcast %cst_8 : f32 to vector<8x128xf32>
    %116 = arith.maximumf %114, %115 : vector<8x128xf32>
    %117 = vector.broadcast %36 : f32 to vector<8x128xf32>
    %118 = arith.mulf %116, %117 : vector<8x128xf32>
    %119 = arith.addf %107, %118 : vector<8x128xf32>
    %120 = vector.broadcast %7 : f32 to vector<8x128xf32>
    %121 = arith.mulf %47, %120 : vector<8x128xf32>
    %122 = vector.broadcast %17 : f32 to vector<8x128xf32>
    %123 = arith.mulf %48, %122 : vector<8x128xf32>
    %124 = arith.addf %121, %123 : vector<8x128xf32>
    %125 = vector.broadcast %27 : f32 to vector<8x128xf32>
    %126 = arith.addf %124, %125 : vector<8x128xf32>
    %cst_9 = arith.constant 0.000000e+00 : f32
    %127 = vector.broadcast %cst_9 : f32 to vector<8x128xf32>
    %128 = arith.maximumf %126, %127 : vector<8x128xf32>
    %129 = vector.broadcast %37 : f32 to vector<8x128xf32>
    %130 = arith.mulf %128, %129 : vector<8x128xf32>
    %131 = arith.addf %119, %130 : vector<8x128xf32>
    %132 = vector.broadcast %8 : f32 to vector<8x128xf32>
    %133 = arith.mulf %47, %132 : vector<8x128xf32>
    %134 = vector.broadcast %18 : f32 to vector<8x128xf32>
    %135 = arith.mulf %48, %134 : vector<8x128xf32>
    %136 = arith.addf %133, %135 : vector<8x128xf32>
    %137 = vector.broadcast %28 : f32 to vector<8x128xf32>
    %138 = arith.addf %136, %137 : vector<8x128xf32>
    %cst_10 = arith.constant 0.000000e+00 : f32
    %139 = vector.broadcast %cst_10 : f32 to vector<8x128xf32>
    %140 = arith.maximumf %138, %139 : vector<8x128xf32>
    %141 = vector.broadcast %38 : f32 to vector<8x128xf32>
    %142 = arith.mulf %140, %141 : vector<8x128xf32>
    %143 = arith.addf %131, %142 : vector<8x128xf32>
    %144 = vector.broadcast %9 : f32 to vector<8x128xf32>
    %145 = arith.mulf %47, %144 : vector<8x128xf32>
    %146 = vector.broadcast %19 : f32 to vector<8x128xf32>
    %147 = arith.mulf %48, %146 : vector<8x128xf32>
    %148 = arith.addf %145, %147 : vector<8x128xf32>
    %149 = vector.broadcast %29 : f32 to vector<8x128xf32>
    %150 = arith.addf %148, %149 : vector<8x128xf32>
    %cst_11 = arith.constant 0.000000e+00 : f32
    %151 = vector.broadcast %cst_11 : f32 to vector<8x128xf32>
    %152 = arith.maximumf %150, %151 : vector<8x128xf32>
    %153 = vector.broadcast %39 : f32 to vector<8x128xf32>
    %154 = arith.mulf %152, %153 : vector<8x128xf32>
    %155 = arith.addf %143, %154 : vector<8x128xf32>
    %156 = vector.broadcast %10 : f32 to vector<8x128xf32>
    %157 = arith.mulf %47, %156 : vector<8x128xf32>
    %158 = vector.broadcast %20 : f32 to vector<8x128xf32>
    %159 = arith.mulf %48, %158 : vector<8x128xf32>
    %160 = arith.addf %157, %159 : vector<8x128xf32>
    %161 = vector.broadcast %30 : f32 to vector<8x128xf32>
    %162 = arith.addf %160, %161 : vector<8x128xf32>
    %cst_12 = arith.constant 0.000000e+00 : f32
    %163 = vector.broadcast %cst_12 : f32 to vector<8x128xf32>
    %164 = arith.maximumf %162, %163 : vector<8x128xf32>
    %165 = vector.broadcast %40 : f32 to vector<8x128xf32>
    %166 = arith.mulf %164, %165 : vector<8x128xf32>
    %167 = arith.addf %155, %166 : vector<8x128xf32>
    %168 = vector.broadcast %41 : f32 to vector<8x128xf32>
    %169 = arith.addf %167, %168 : vector<8x128xf32>
    %cst_13 = arith.constant -6.000000e+01 : f32
    %170 = vector.broadcast %cst_13 : f32 to vector<8x128xf32>
    %171 = arith.maximumf %169, %170 : vector<8x128xf32>
    %cst_14 = arith.constant 0.000000e+00 : f32
    %172 = vector.broadcast %cst_14 : f32 to vector<8x128xf32>
    %173 = arith.subf %172, %171 : vector<8x128xf32>
    %174 = math.exp %173 : vector<8x128xf32>
    %cst_15 = arith.constant 1.000000e+00 : f32
    %175 = vector.broadcast %cst_15 : f32 to vector<8x128xf32>
    %176 = arith.addf %175, %174 : vector<8x128xf32>
    %177 = tpu.reciprocal %176 {approx = true} : vector<8x128xf32> -> vector<8x128xf32>
    %178 = arith.mulf %176, %177 : vector<8x128xf32>
    %cst_16 = arith.constant 2.000000e+00 : f32
    %179 = vector.broadcast %cst_16 : f32 to vector<8x128xf32>
    %180 = arith.subf %179, %178 : vector<8x128xf32>
    %181 = arith.mulf %177, %180 : vector<8x128xf32>
    %182 = arith.index_cast %43 : i32 to index
    %c0_17 = arith.constant 0 : index
    %183 = vector.load %arg4[%182, %c0_17] : memref<8x128xf32, #tpu.memory_space<vmem>>, vector<8x128xf32>
    tpu.vector_store %arg4[%182, %c0_17], %181 {strides = array<i32>} : memref<8x128xf32, #tpu.memory_space<vmem>>, vector<8x128xf32>,
    %c1_i32 = arith.constant 1 : i32
    return
  }
  func.func @transform_0(%arg0: i32) -> i32 {
    %c0_i32 = arith.constant 0 : i32
    %c0_i32_0 = arith.constant 0 : i32
    return %c0_i32 : i32
  }
  func.func @transform_1(%arg0: i32) -> (i32, i32) {
    %c0_i32 = arith.constant 0 : i32
    %c0_i32_0 = arith.constant 0 : i32
    %c0_i32_1 = arith.constant 0 : i32
    return %c0_i32, %c0_i32_0 : i32, i32
  }
  func.func @transform_2(%arg0: i32) -> (i32, i32) {
    %c0_i32 = arith.constant 0 : i32
    %c0_i32_0 = arith.constant 0 : i32
    return %arg0, %c0_i32 : i32, i32
  }
  func.func @transform_3(%arg0: i32) -> (i32, i32) {
    %c0_i32 = arith.constant 0 : i32
    %c0_i32_0 = arith.constant 0 : i32
    return %arg0, %c0_i32 : i32, i32
  }
}

</mosaic_0001>

<llo_original>
// kernel: tpu_custom_call.1
$region0: #{tpu_custom_call.1}
  #allocation0 [shape = 'u32[]', space=smem, size = 0x4, offset = 0x4, fixed_abs, tag = 'smem constant byte address 0x4 - core index']
  #allocation1 [shape = 'u32[144,128]{1,0:T(1,128)}', space=vmem, size = 0x12000, scoped, tag = 'internal scratch']
  %s0 = inlined_call_operand.hbm [shape: f32[64], index: 0, kind: input, shape index: {}]
  %s1 = inlined_call_operand.hbm [shape: f32[256,256], index: 1, kind: input, shape index: {}]
  %s2 = inlined_call_operand.hbm [shape: f32[8,256], index: 2, kind: input, shape index: {}]
  %s3 = inlined_call_operand.hbm [shape: f32[8,128], index: 3, kind: output, shape index: {}]
  %s4 = sld [smem:[#allocation0]]
  $region34: #{tpu_custom_call.1} parent=0
    _
  %s6 = ssub.s32 1, %s4
  %s7 = scalar_select 0, %s6, %s4
  $region1: #{tpu_custom_call.1} parent=0
    #allocation2 [shape = 'u8[512]{0}', space=smem, size = 0x200, scoped, tag = 'input window, operand 0, single buffered']
    #allocation3 [shape = 's32[1]{0}', space=sflag, size = 0x4, scoped, tag = 'scoped memory for tpu_custom_call.1']
    #allocation4 [shape = 's32[1]{0}', space=sflag, size = 0x4, scoped, tag = 'scoped memory for tpu_custom_call.1']
    #allocation5 [shape = 's32[1]{0}', space=sflag, size = 0x4, scoped, tag = 'scoped memory for tpu_custom_call.1']
    #allocation6 [shape = 'u8[262144]{0}', space=vmem, size = 0x40000, scoped, tag = 'input window, operand 1, single buffered']
    #allocation7 [shape = 'u8[8192]{0}', space=vmem, size = 0x2000, scoped, tag = 'input window, operand 2, single buffered']
    #allocation8 [shape = 's32[1]{0}', space=sflag, size = 0x4, scoped, tag = 'scoped memory for tpu_custom_call.1']
    #allocation9 [shape = 'u8[4096]{0}', space=vmem, size = 0x1000, scoped, tag = 'output window, operand 0, single buffered']
    %8 = vsyncpa [#allocation5], 0
    %9 = vsyncpa [#allocation3], 0
    %10 = vsyncpa [#allocation8], 0
    %11 = vsyncpa [#allocation4], 0
    // Predicated region
    $region2: #{tpu_custom_call.1} parent=1 // pred_check
      _
    $region3: #{tpu_custom_call.1} parent=1 // pred_check_branch
      %13 = sbr.rel (0) target = $region5
    $region4: #{tpu_custom_call.1} parent=1 // pred_region
      %s15 = ssub.s32 16, 16
      %16 = vsyncadd [#allocation5], %s15
      %19 = dma.hbm_to_smem %s0, 16, [#allocation2], [#allocation5]
    $region5: #{tpu_custom_call.1} parent=1 // pred_fallthru
      _
    // Predicated region
    $region6: #{tpu_custom_call.1} parent=1 // pred_check
      _
    $region7: #{tpu_custom_call.1} parent=1 // pred_check_branch
      %21 = sbr.rel (0) target = $region9
    $region8: #{tpu_custom_call.1} parent=1 // pred_region
      %s23 = ssub.s32 8192, 8192
      %24 = vsyncadd [#allocation3], %s23
      %s25 = sshll.u32 [#allocation6], 4
      %s26 = int_to_ptr.vmem [resolvable:$true] %s25
      %31 = dma.hbm_to_vmem [thread:$0]  %s1, 8192, %s26, [#allocation3], 256, 256, 16
    $region9: #{tpu_custom_call.1} parent=1 // pred_fallthru
      _
    // Predicated region
    $region10: #{tpu_custom_call.1} parent=1 // pred_check
      _
    $region11: #{tpu_custom_call.1} parent=1 // pred_check_branch
      %33 = sbr.rel (0) target = $region13
    $region12: #{tpu_custom_call.1} parent=1 // pred_region
      %s35 = ssub.s32 256, 256
      %36 = vsyncadd [#allocation8], %s35
      %s38 = sshll.u32 [#allocation7], 4
      %s39 = int_to_ptr.vmem [resolvable:$true] %s38
      %41 = dma.hbm_to_vmem [thread:$0]  %s2, 256, %s39, [#allocation8]
    $region13: #{tpu_custom_call.1} parent=1 // pred_fallthru
      _
    // Predicated region
    $region14: #{tpu_custom_call.1} parent=1 // pred_check
      _
    $region15: #{tpu_custom_call.1} parent=1 // pred_check_branch
      %43 = sbr.rel (0) target = $region17
    $region16: #{tpu_custom_call.1} parent=1 // pred_region
      %44 = dma.done [#allocation5], 16
    $region17: #{tpu_custom_call.1} parent=1 // pred_fallthru
      _
    // Predicated region
    $region18: #{tpu_custom_call.1} parent=1 // pred_check
      _
    $region19: #{tpu_custom_call.1} parent=1 // pred_check_branch
      %46 = sbr.rel (0) target = $region21
    $region20: #{tpu_custom_call.1} parent=1 // pred_region
      %47 = dma.done [#allocation3], 8192
    $region21: #{tpu_custom_call.1} parent=1 // pred_fallthru
      _
    // Predicated region
    $region22: #{tpu_custom_call.1} parent=1 // pred_check
      _
    $region23: #{tpu_custom_call.1} parent=1 // pred_check_branch
      %49 = sbr.rel (0) target = $region25
    $region24: #{tpu_custom_call.1} parent=1 // pred_region
      %50 = dma.done [#allocation8], 256
    $region25: #{tpu_custom_call.1} parent=1 // pred_fallthru
      _
    %51 = sfence
    %v52 = vld [vmem:[#allocation6] sm:$0xff]
    %v53 = vld [vmem:[#allocation6 + $0x8] sm:$0xff]
    %v54 = vld [vmem:[#allocation6 + $0x10] sm:$0xff]
    %v55 = vld [vmem:[#allocation6 + $0x18] sm:$0xff]
    %v56 = vld [vmem:[#allocation6 + $0x20] sm:$0xff]
    %v57 = vld [vmem:[#allocation6 + $0x28] sm:$0xff]
    %v58 = vld [vmem:[#allocation6 + $0x30] sm:$0xff]
    %v59 = vld [vmem:[#allocation6 + $0x38] sm:$0xff]
    %v60 = vld [vmem:[#allocation6 + $0x40] sm:$0xff]
    %v61 = vld [vmem:[#allocation6 + $0x48] sm:$0xff]
    %v62 = vld [vmem:[#allocation6 + $0x50] sm:$0xff]
    %v63 = vld [vmem:[#allocation6 + $0x58] sm:$0xff]
    %v64 = vld [vmem:[#allocation6 + $0x60] sm:$0xff]
    %v65 = vld [vmem:[#allocation6 + $0x68] sm:$0xff]
    %v66 = vld [vmem:[#allocation6 + $0x70] sm:$0xff]
    %v67 = vld [vmem:[#allocation6 + $0x78] sm:$0xff]
    %v68 = vld [vmem:[#allocation6 + $0x80] sm:$0xff]
    %v69 = vld [vmem:[#allocation6 + $0x88] sm:$0xff]
    %v70 = vld [vmem:[#allocation6 + $0x90] sm:$0xff]
    %v71 = vld [vmem:[#allocation6 + $0x98] sm:$0xff]
    %v72 = vld [vmem:[#allocation6 + $0xa0] sm:$0xff]
    %v73 = vld [vmem:[#allocation6 + $0xa8] sm:$0xff]
    %v74 = vld [vmem:[#allocation6 + $0xb0] sm:$0xff]
    %v75 = vld [vmem:[#allocation6 + $0xb8] sm:$0xff]
    %v76 = vld [vmem:[#allocation6 + $0xc0] sm:$0xff]
    %v77 = vld [vmem:[#allocation6 + $0xc8] sm:$0xff]
    %v78 = vld [vmem:[#allocation6 + $0xd0] sm:$0xff]
    %v79 = vld [vmem:[#allocation6 + $0xd8] sm:$0xff]
    %v80 = vld [vmem:[#allocation6 + $0xe0] sm:$0xff]
    %v81 = vld [vmem:[#allocation6 + $0xe8] sm:$0xff]
    %v82 = vld [vmem:[#allocation6 + $0xf0] sm:$0xff]
    %v83 = vld [vmem:[#allocation6 + $0xf8] sm:$0xff]
    %v84 = vld [vmem:[#allocation6 + $0x100] sm:$0xff]
    %v85 = vld [vmem:[#allocation6 + $0x108] sm:$0xff]
    %v86 = vld [vmem:[#allocation6 + $0x110] sm:$0xff]
    %v87 = vld [vmem:[#allocation6 + $0x118] sm:$0xff]
    %v88 = vld [vmem:[#allocation6 + $0x120] sm:$0xff]
    %v89 = vld [vmem:[#allocation6 + $0x128] sm:$0xff]
    %v90 = vld [vmem:[#allocation6 + $0x130] sm:$0xff]
    %v91 = vld [vmem:[#allocation6 + $0x138] sm:$0xff]
    %v92 = vld [vmem:[#allocation6 + $0x140] sm:$0xff]
    %v93 = vld [vmem:[#allocation6 + $0x148] sm:$0xff]
    %v94 = vld [vmem:[#allocation6 + $0x150] sm:$0xff]
    %v95 = vld [vmem:[#allocation6 + $0x158] sm:$0xff]
    %v96 = vld [vmem:[#allocation6 + $0x160] sm:$0xff]
    %v97 = vld [vmem:[#allocation6 + $0x168] sm:$0xff]
    %v98 = vld [vmem:[#allocation6 + $0x170] sm:$0xff]
    %v99 = vld [vmem:[#allocation6 + $0x178] sm:$0xff]
    %v100 = vld [vmem:[#allocation6 + $0x180] sm:$0xff]
    %v101 = vld [vmem:[#allocation6 + $0x188] sm:$0xff]
    %v102 = vld [vmem:[#allocation6 + $0x190] sm:$0xff]
    %v103 = vld [vmem:[#allocation6 + $0x198] sm:$0xff]
    %v104 = vld [vmem:[#allocation6 + $0x1a0] sm:$0xff]
    %v105 = vld [vmem:[#allocation6 + $0x1a8] sm:$0xff]
    %v106 = vld [vmem:[#allocation6 + $0x1b0] sm:$0xff]
    %v107 = vld [vmem:[#allocation6 + $0x1b8] sm:$0xff]
    %v108 = vld [vmem:[#allocation6 + $0x1c0] sm:$0xff]
    %v109 = vld [vmem:[#allocation6 + $0x1c8] sm:$0xff]
    %v110 = vld [vmem:[#allocation6 + $0x1d0] sm:$0xff]
    %v111 = vld [vmem:[#allocation6 + $0x1d8] sm:$0xff]
    %v112 = vld [vmem:[#allocation6 + $0x1e0] sm:$0xff]
    %v113 = vld [vmem:[#allocation6 + $0x1e8] sm:$0xff]
    %v114 = vld [vmem:[#allocation6 + $0x1f0] sm:$0xff]
    %v115 = vld [vmem:[#allocation6 + $0x1f8] sm:$0xff]
    %s116 = sld [smem:[#allocation2]]
    %s117 = sld [smem:[#allocation2 + $0x1]]
    %s118 = sld [smem:[#allocation2 + $0x2]]
    %s119 = sld [smem:[#allocation2 + $0x3]]
    %s120 = sld [smem:[#allocation2 + $0x4]]
    %s121 = sld [smem:[#allocation2 + $0x5]]
    %s122 = sld [smem:[#allocation2 + $0x6]]
    %s123 = sld [smem:[#allocation2 + $0x7]]
    %s124 = sld [smem:[#allocation2 + $0x8]]
    %s125 = sld [smem:[#allocation2 + $0x9]]
    %s126 = sld [smem:[#allocation2 + $0xa]]
    %s127 = sld [smem:[#allocation2 + $0xb]]
    %s128 = sld [smem:[#allocation2 + $0xc]]
    %s129 = sld [smem:[#allocation2 + $0xd]]
    %s130 = sld [smem:[#allocation2 + $0xe]]
    %s131 = sld [smem:[#allocation2 + $0xf]]
    %s132 = sld [smem:[#allocation2 + $0x10]]
    %s133 = sld [smem:[#allocation2 + $0x11]]
    %s134 = sld [smem:[#allocation2 + $0x12]]
    %s135 = sld [smem:[#allocation2 + $0x13]]
    %s136 = sld [smem:[#allocation2 + $0x14]]
    %s137 = sld [smem:[#allocation2 + $0x15]]
    %s138 = sld [smem:[#allocation2 + $0x16]]
    %s139 = sld [smem:[#allocation2 + $0x17]]
    %s140 = sld [smem:[#allocation2 + $0x18]]
    %s141 = sld [smem:[#allocation2 + $0x19]]
    %s142 = sld [smem:[#allocation2 + $0x1a]]
    %s143 = sld [smem:[#allocation2 + $0x1b]]
    %s144 = sld [smem:[#allocation2 + $0x1c]]
    %s145 = sld [smem:[#allocation2 + $0x1d]]
    %s146 = sld [smem:[#allocation2 + $0x1e]]
    %s147 = sld [smem:[#allocation2 + $0x1f]]
    %s148 = sld [smem:[#allocation2 + $0x20]]
    %s149 = sld [smem:[#allocation2 + $0x21]]
    %s150 = sld [smem:[#allocation2 + $0x22]]
    %s151 = sld [smem:[#allocation2 + $0x23]]
    %s152 = sld [smem:[#allocation2 + $0x24]]
    %s153 = sld [smem:[#allocation2 + $0x25]]
    %s154 = sld [smem:[#allocation2 + $0x26]]
    %s155 = sld [smem:[#allocation2 + $0x27]]
    %s156 = sld [smem:[#allocation2 + $0x28]]
    %s157 = smul.u32 0, 2
    %s158 = smul.addr %s157, 8
    %s159 = scalar_lea.vmem [#allocation7], %s158
    %v160 = vld [vmem:[%s159] sm:$0xff]
    %v161 = vld [vmem:[%s159 + $0x8] sm:$0xff]
    %162 = vmatprep.subr.mxu0 %v53
    %163 = vmatpush1.msra.mxu0 %v52
    %164 = vmatprep.subr.mxu0 %v55
    %165 = vmatpush1.msra.mxu0 %v54
    %166 = vmatprep.subr.mxu0 %v57
    %167 = vmatpush1.msra.mxu0 %v56
    %168 = vmatprep.subr.mxu0 %v59
    %169 = vmatpush1.msra.mxu0 %v58
    %170 = vmatprep.subr.mxu0 %v61
    %171 = vmatpush1.msra.mxu0 %v60
    %172 = vmatprep.subr.mxu0 %v63
    %173 = vmatpush1.msra.mxu0 %v62
    %174 = vmatprep.subr.mxu0 %v65
    %175 = vmatpush1.msra.mxu0 %v64
    %176 = vmatprep.subr.mxu0 %v67
    %177 = vmatpush1.msra.mxu0 %v66
    %178 = vmatprep.subr.mxu0 %v69
    %179 = vmatpush1.msra.mxu0 %v68
    %180 = vmatprep.subr.mxu0 %v71
    %181 = vmatpush1.msra.mxu0 %v70
    %182 = vmatprep.subr.mxu0 %v73
    %183 = vmatpush1.msra.mxu0 %v72
    %184 = vmatprep.subr.mxu0 %v75
    %185 = vmatpush1.msra.mxu0 %v74
    %186 = vmatprep.subr.mxu0 %v77
    %187 = vmatpush1.msra.mxu0 %v76
    %188 = vmatprep.subr.mxu0 %v79
    %189 = vmatpush1.msra.mxu0 %v78
    %190 = vmatprep.subr.mxu0 %v81
    %191 = vmatpush1.msra.mxu0 %v80
    %192 = vmatprep.subr.mxu0 %v83
    %193 = vmatpush1.msra.mxu0 %v82
    %194 = vmatprep.subr.mxu0 %v85
    %195 = vmatpush1.msra.mxu0 %v84
    %196 = vmatprep.subr.mxu0 %v87
    %197 = vmatpush1.msra.mxu0 %v86
    %198 = vmatprep.subr.mxu0 %v89
    %199 = vmatpush1.msra.mxu0 %v88
    %200 = vmatprep.subr.mxu0 %v91
    %201 = vmatpush1.msra.mxu0 %v90
    %202 = vmatprep.subr.mxu0 %v93
    %203 = vmatpush1.msra.mxu0 %v92
    %204 = vmatprep.subr.mxu0 %v95
    %205 = vmatpush1.msra.mxu0 %v94
    %206 = vmatprep.subr.mxu0 %v97
    %207 = vmatpush1.msra.mxu0 %v96
    %208 = vmatprep.subr.mxu0 %v99
    %209 = vmatpush1.msra.mxu0 %v98
    %210 = vmatprep.subr.mxu0 %v101
    %211 = vmatpush1.msra.mxu0 %v100
    %212 = vmatprep.subr.mxu0 %v103
    %213 = vmatpush1.msra.mxu0 %v102
    %214 = vmatprep.subr.mxu0 %v105
    %215 = vmatpush1.msra.mxu0 %v104
    %216 = vmatprep.subr.mxu0 %v107
    %217 = vmatpush1.msra.mxu0 %v106
    %218 = vmatprep.subr.mxu0 %v109
    %219 = vmatpush1.msra.mxu0 %v108
    %220 = vmatprep.subr.mxu0 %v111
    %221 = vmatpush1.msra.mxu0 %v110
    %222 = vmatprep.subr.mxu0 %v113
    %223 = vmatpush1.msra.mxu0 %v112
    %224 = vmatprep.subr.mxu0 %v115
    %225 = vmatpush1.msra.mxu0 %v114
    %226 = vmatprep.mubr.f32.mxu0 %v161
    %227 = vmatmul.mubr.f32.gmra.mrb[0].mxu0 %v160
    %v228 = vpop.f32.mrb[0].mxu0
    %v229 = vadd.f32 0.0, %v228
    %v230 = vpop.f32.mrb[0].mxu0
    %v231 = vadd.f32 0.0, %v230
    %232 = vdwg.mxu0
    %v233 = vstv %s116
    %v234 = vmul.f32 %v229, %v233
    %v235 = vstv %s126
    %v236 = vmul.f32 %v231, %v235
    %v237 = vadd.f32 %v234, %v236
    %v238 = vstv %s136
    %v239 = vadd.f32 %v237, %v238
    %v240 = vmax.f32 %v239, 0.0
    %v241 = vstv %s146
    %v242 = vmul.f32 %v240, %v241
    %v243 = vstv %s117
    %v244 = vmul.f32 %v229, %v243
    %v245 = vstv %s127
    %v246 = vmul.f32 %v231, %v245
    %v247 = vadd.f32 %v244, %v246
    %v248 = vstv %s137
    %v249 = vadd.f32 %v247, %v248
    %v250 = vmax.f32 %v249, 0.0
    %v251 = vstv %s147
    %v252 = vmul.f32 %v250, %v251
    %v253 = vadd.f32 %v242, %v252
    %v254 = vstv %s118
    %v255 = vmul.f32 %v229, %v254
    %v256 = vstv %s128
    %v257 = vmul.f32 %v231, %v256
    %v258 = vadd.f32 %v255, %v257
    %v259 = vstv %s138
    %v260 = vadd.f32 %v258, %v259
    %v261 = vmax.f32 %v260, 0.0
    %v262 = vstv %s148
    %v263 = vmul.f32 %v261, %v262
    %v264 = vadd.f32 %v253, %v263
    %v265 = vstv %s119
    %v266 = vmul.f32 %v229, %v265
    %v267 = vstv %s129
    %v268 = vmul.f32 %v231, %v267
    %v269 = vadd.f32 %v266, %v268
    %v270 = vstv %s139
    %v271 = vadd.f32 %v269, %v270
    %v272 = vmax.f32 %v271, 0.0
    %v273 = vstv %s149
    %v274 = vmul.f32 %v272, %v273
    %v275 = vadd.f32 %v264, %v274
    %v276 = vstv %s120
    %v277 = vmul.f32 %v229, %v276
    %v278 = vstv %s130
    %v279 = vmul.f32 %v231, %v278
    %v280 = vadd.f32 %v277, %v279
    %v281 = vstv %s140
    %v282 = vadd.f32 %v280, %v281
    %v283 = vmax.f32 %v282, 0.0
    %v284 = vstv %s150
    %v285 = vmul.f32 %v283, %v284
    %v286 = vadd.f32 %v275, %v285
    %v287 = vstv %s121
    %v288 = vmul.f32 %v229, %v287
    %v289 = vstv %s131
    %v290 = vmul.f32 %v231, %v289
    %v291 = vadd.f32 %v288, %v290
    %v292 = vstv %s141
    %v293 = vadd.f32 %v291, %v292
    %v294 = vmax.f32 %v293, 0.0
    %v295 = vstv %s151
    %v296 = vmul.f32 %v294, %v295
    %v297 = vadd.f32 %v286, %v296
    %v298 = vstv %s122
    %v299 = vmul.f32 %v229, %v298
    %v300 = vstv %s132
    %v301 = vmul.f32 %v231, %v300
    %v302 = vadd.f32 %v299, %v301
    %v303 = vstv %s142
    %v304 = vadd.f32 %v302, %v303
    %v305 = vmax.f32 %v304, 0.0
    %v306 = vstv %s152
    %v307 = vmul.f32 %v305, %v306
    %v308 = vadd.f32 %v297, %v307
    %v309 = vstv %s123
    %v310 = vmul.f32 %v229, %v309
    %v311 = vstv %s133
    %v312 = vmul.f32 %v231, %v311
    %v313 = vadd.f32 %v310, %v312
    %v314 = vstv %s143
    %v315 = vadd.f32 %v313, %v314
    %v316 = vmax.f32 %v315, 0.0
    %v317 = vstv %s153
    %v318 = vmul.f32 %v316, %v317
    %v319 = vadd.f32 %v308, %v318
    %v320 = vstv %s124
    %v321 = vmul.f32 %v229, %v320
    %v322 = vstv %s134
    %v323 = vmul.f32 %v231, %v322
    %v324 = vadd.f32 %v321, %v323
    %v325 = vstv %s144
    %v326 = vadd.f32 %v324, %v325
    %v327 = vmax.f32 %v326, 0.0
    %v328 = vstv %s154
    %v329 = vmul.f32 %v327, %v328
    %v330 = vadd.f32 %v319, %v329
    %v331 = vstv %s125
    %v332 = vmul.f32 %v229, %v331
    %v333 = vstv %s135
    %v334 = vmul.f32 %v231, %v333
    %v335 = vadd.f32 %v332, %v334
    %v336 = vstv %s145
    %v337 = vadd.f32 %v335, %v336
    %v338 = vmax.f32 %v337, 0.0
    %v339 = vstv %s155
    %v340 = vmul.f32 %v338, %v339
    %v341 = vadd.f32 %v330, %v340
    %v342 = vstv %s156
    %v343 = vadd.f32 %v341, %v342
    %v344 = vmax.f32 %v343, -60.0
    %v345 = vsub.f32 0.0, %v344
    %v346 = vmul.f32 %v345, 1.442695
    %v347 = vpow.pop %v346
    %v348 = vadd.f32 %v347, 1.0
    %v349 = vrcp.pop %v348
    %v350 = vmul.f32 %v348, %v349
    %v351 = vsub.f32 2.0, %v350
    %v352 = vmul.f32 %v349, %v351
    %353 = vst [vmem:[#allocation9] sm:$0xff] %v352
    // Predicated region
    $region26: #{tpu_custom_call.1} parent=1 // pred_check
      _
    $region27: #{tpu_custom_call.1} parent=1 // pred_check_branch
      %355 = sbr.rel (0) target = $region29
    $region28: #{tpu_custom_call.1} parent=1 // pred_region
      %s357 = ssub.s32 128, 128
      %358 = vsyncadd [#allocation4], %s357
      %s360 = sshll.u32 [#allocation9], 4
      %s361 = int_to_ptr.vmem [resolvable:$true] %s360
      %363 = dma.vmem_to_hbm [thread:$0]  %s361, 128, %s3, [#allocation4]
    $region29: #{tpu_custom_call.1} parent=1 // pred_fallthru
      _
    // Predicated region
    $region30: #{tpu_custom_call.1} parent=1 // pred_check
      _
    $region31: #{tpu_custom_call.1} parent=1 // pred_check_branch
      %365 = sbr.rel (0) target = $region33
    $region32: #{tpu_custom_call.1} parent=1 // pred_region
      %366 = dma.done [#allocation4], 128
    $region33: #{tpu_custom_call.1} parent=1 // pred_fallthru
      _
    %367 = vsyncpa [#allocation3], 1
    %368 = vsyncpa [#allocation8], 1
    %369 = vsyncpa [#allocation4], 1
    %370 = vsyncpa [#allocation5], 1

</llo_original>
